<compile_context>
chip_gen: v6e
topology: v6e:2x2x1
jax: 0.10.0
libtpu: 0.0.40
codegen_flags: <defaults>
</compile_context>

<pallas_src>
import jax
import jax.numpy as jnp
import numpy as np
from jax.experimental import pallas as pl
from jax.experimental.pallas import tpu as pltpu

# ---------------- configuration (mirrors CNN_earlycasevar.__init__) ----------------
INPUT_SIZE_CASE = 1      # must be 1: the torch repeat/reshape trick only works then
INPUT_SIZE_PROCESS = 3
LENGTH = 8
NR_CNN_LAYERS = 2
NR_OUT_CHANNELS = 10
KERNEL_SIZE = 2
STRIDE = 1               # TODO(synk): only stride=1 implemented in the Pallas path
NR_DENSE_LAYERS = 1
DENSE_WIDTH = 20
NR_OUTPUTS = 1
BN_EPS = 1e-5

TILE_B_MAX = 2048        # batch tile upper bound (weights stay VMEM-resident)
MIN_GRID_STEPS = 2       # >= 2 (even) grid steps so v7x's two TCs both get work
LANES = 128              # all weight buffers are lane-padded to 128

assert STRIDE == 1
assert INPUT_SIZE_CASE == 1


def conv1d_size_out(size, kernel_size=KERNEL_SIZE, stride=STRIDE):
    return (size - (kernel_size - 1) - 1) // stride + 1


def _round_up(x, m):
    return ((x + m - 1) // m) * m


# ---------------- deterministic parameter init (PyTorch-like uniform) ----------------
def _linear_init(key, fan_in, fan_out):
    k1, k2 = jax.random.split(key)
    bound = 1.0 / np.sqrt(fan_in)
    w = jax.random.uniform(k1, (fan_out, fan_in), jnp.float32, -bound, bound)
    b = jax.random.uniform(k2, (fan_out,), jnp.float32, -bound, bound)
    return w, b


def _conv_init(key, c_in, c_out, k):
    k1, k2 = jax.random.split(key)
    bound = 1.0 / np.sqrt(c_in * k)
    w = jax.random.uniform(k1, (c_out, c_in, k), jnp.float32, -bound, bound)
    b = jax.random.uniform(k2, (c_out,), jnp.float32, -bound, bound)
    return w, b


def _fold_bn(w, b, gamma, beta, mean, var, eps=BN_EPS):
    scale = np.asarray(gamma) / np.sqrt(np.asarray(var) + eps)
    return np.asarray(w) * scale[:, None, None], (np.asarray(b) - np.asarray(mean)) * scale + np.asarray(beta)


def _conv_banded(wf, l_in, l_out):
    """Stride-1 Conv1d (folded weights, (C_out,C_in,K)) as a dense matrix acting on a
    position-major slab (lane = l*C_in + c); output is position-major (l*C_out + o)."""
    c_out, c_in, ksz = wf.shape
    m = np.zeros((l_in * c_in, l_out * c_out), dtype=np.float32)
    for l in range(l_out):
        for k in range(ksz):
            m[(l + k) * c_in:(l + k + 1) * c_in,
              l * c_out:(l + 1) * c_out] = wf[:, :, k].T        # [i, o] = w[o, i, k]
    return m


def _conv0_banded(wf, l_in, l_out):
    """First conv layer as a dense matrix acting on a CHANNEL-major slab with the
    constant x_case channel folded into a single trailing lane.
      input lane layout : c*l_in + l  for c in [0, C_in-1)   (x_process channels + t)
                          n_full*l_in                         (single x_case lane)
      output layout     : position-major, col = l*C_out + o
    """
    c_out, c_in, ksz = wf.shape
    n_full = c_in - INPUT_SIZE_CASE
    m = np.zeros((n_full * l_in + INPUT_SIZE_CASE, l_out * c_out), dtype=np.float32)
    case_row = wf[:, n_full:, :].sum(axis=(1, 2))               # sum_k w[o, case, k]
    for l in range(l_out):
        for k in range(ksz):
            for c in range(n_full):
                m[c * l_in + (l + k), l * c_out:(l + 1) * c_out] = wf[:, c, k]
        m[n_full * l_in, l * c_out:(l + 1) * c_out] = case_row  # x_case is constant in l
    return m


def build_params(key):
    """Raw PyTorch-layout parameters + layer-size bookkeeping."""
    c_in0 = INPUT_SIZE_PROCESS + 1 + INPUT_SIZE_CASE
    conv_in = [c_in0] + [NR_OUT_CHANNELS] * (NR_CNN_LAYERS - 1)
    raw_conv = []
    for nr in range(NR_CNN_LAYERS):
        key, sub = jax.random.split(key)
        w, b = _conv_init(sub, conv_in[nr], NR_OUT_CHANNELS, KERNEL_SIZE)
        gamma = jnp.ones((NR_OUT_CHANNELS,), jnp.float32)
        beta = jnp.zeros((NR_OUT_CHANNELS,), jnp.float32)
        mean = jnp.zeros((NR_OUT_CHANNELS,), jnp.float32)
        var = jnp.ones((NR_OUT_CHANNELS,), jnp.float32)
        raw_conv.append((w, b, gamma, beta, mean, var))

    l_ins, l_outs = [], []
    s = LENGTH
    for _ in range(NR_CNN_LAYERS):
        l_ins.append(s)
        s = conv1d_size_out(s)
        l_outs.append(s)
    conv_size = s
    assert conv_size > 0
    linear_input_size = conv_size * NR_OUT_CHANNELS

    raw_dense = []
    in_sizes = [linear_input_size] + [DENSE_WIDTH] * (NR_DENSE_LAYERS - 1)
    for nr in range(NR_DENSE_LAYERS):
        key, sub = jax.random.split(key)
        raw_dense.append(_linear_init(sub, in_sizes[nr], DENSE_WIDTH))
    key, sub = jax.random.split(key)
    raw_last = _linear_init(sub, DENSE_WIDTH, 10)
    key, sub = jax.random.split(key)
    raw_mean = _linear_init(sub, 10, NR_OUTPUTS)
    key, sub = jax.random.split(key)
    raw_logvar = _linear_init(sub, 10, 1)

    raw = dict(conv=raw_conv, dense=raw_dense, last=raw_last,
               mean=raw_mean, logvar=raw_logvar)
    return raw, (l_ins, l_outs, conv_size)


def build_kernel_params(raw, sizes, compute_dtype=jnp.bfloat16):
    """Lower raw params to three VMEM-resident buffers:
         w0      : (slab_w, 128)          compute_dtype   first banded conv matrix
         w_rest  : (n_hidden*128, 128)    compute_dtype   remaining layers, lane/row padded
         b_pack  : (8, 128)               float32         one bias row per layer
       Zero lane/row padding is self-consistent: padded output lanes stay exactly 0
       through bias+ReLU, and padded weight rows multiply those zero lanes.
    """
    l_ins, l_outs, conv_size = sizes
    mats, biases = [], []

    # conv 0 (channel-major input, x_case folded)
    w, b, gamma, beta, mean, var = raw['conv'][0]
    wf, bf = _fold_bn(w, b, gamma, beta, mean, var)
    mats.append(_conv0_banded(wf, l_ins[0], l_outs[0]))
    biases.append(np.tile(bf, l_outs[0]))
    # remaining convs (position-major in/out)
    for nr in range(1, NR_CNN_LAYERS):
        w, b, gamma, beta, mean, var = raw['conv'][nr]
        wf, bf = _fold_bn(w, b, gamma, beta, mean, var)
        mats.append(_conv_banded(wf, l_ins[nr], l_outs[nr]))
        biases.append(np.tile(bf, l_outs[nr]))

    # dense 0: permute rows from torch channel-major flatten (c*L+l) to position-major (l*C+c)
    w0, b0 = raw['dense'][0]
    w0 = np.asarray(w0)
    w0_flat = (w0.T.reshape(NR_OUT_CHANNELS, conv_size, DENSE_WIDTH)
                  .transpose(1, 0, 2)
                  .reshape(conv_size * NR_OUT_CHANNELS, DENSE_WIDTH))
    mats.append(w0_flat)
    biases.append(np.asarray(b0))
    for (w, b) in raw['dense'][1:]:
        mats.append(np.asarray(w).T)
        biases.append(np.asarray(b))

    wl, bl = raw['last']
    mats.append(np.asarray(wl).T)
    biases.append(np.asarray(bl))

    # fused mean|logvar head
    wm, bm = raw['mean']
    wv, bv = raw['logvar']
    mats.append(np.concatenate([np.asarray(wm).T, np.asarray(wv).T], axis=1))
    biases.append(np.concatenate([np.asarray(bm), np.asarray(bv)]))

    assert all(m.shape[1] <= LANES for m in mats)
    assert all(m.shape[0] <= LANES for m in mats[1:])

    slab_w = mats[0].shape[0]
    w0_pad = np.zeros((slab_w, LANES), np.float32)
    w0_pad[:, :mats[0].shape[1]] = mats[0]

    n_hidden = len(mats) - 1
    w_rest = np.zeros((n_hidden * LANES, LANES), np.float32)
    for i, m in enumerate(mats[1:]):
        r, c = m.shape
        w_rest[i * LANES:i * LANES + r, :c] = m

    b_pack = np.zeros((_round_up(len(biases), 8), LANES), np.float32)
    for i, b in enumerate(biases):
        b_pack[i, :b.shape[0]] = b

    return (jnp.asarray(w0_pad, compute_dtype),
            jnp.asarray(w_rest, compute_dtype),
            jnp.asarray(b_pack, jnp.float32))


# ---------------- the Pallas kernel ----------------
N_LAYERS = NR_CNN_LAYERS + NR_DENSE_LAYERS + 2   # convs + denses + last + fused head
N_HEADS = NR_OUTPUTS + 1


def _make_kernel(n_layers, n_heads, compute_dtype):
    def kernel(x_ref, w0_ref, wr_ref, b_ref, out_ref):
        h = x_ref[...]                                                  # (tile_b, slab_w)
        # layer 0: first banded conv matrix (dedicated ref, exact row count)
        z = jnp.dot(h, w0_ref[...], preferred_element_type=jnp.float32) + b_ref[0:1, :]
        h = jnp.maximum(z, 0.0).astype(compute_dtype)                   # (tile_b, 128)
        # remaining layers: tile-aligned static 128-row slices of the packed buffer
        for i in range(1, n_layers):
            w = wr_ref[(i - 1) * LANES:i * LANES, :]                    # (128, 128)
            z = jnp.dot(h, w, preferred_element_type=jnp.float32) + b_ref[i:i + 1, :]
            if i + 1 < n_layers:
                h = jnp.maximum(z, 0.0).astype(compute_dtype)
            else:
                out_ref[...] = z[:, :n_heads]                           # fused mean|logvar
    return kernel


def _make_slab(x_case, x_process, t, compute_dtype):
    """Channel-major slab, x_case folded into one lane: no transpose, no broadcast."""
    B = x_process.shape[0]
    return jnp.concatenate(
        [x_process.reshape(B, INPUT_SIZE_PROCESS * LENGTH),
         t.reshape(B, LENGTH),
         x_case.reshape(B, INPUT_SIZE_CASE)], axis=1).astype(compute_dtype)


def forward_pallas(x_case, x_process, t, kparams, compute_dtype=jnp.bfloat16):
    w0_pad, w_rest, b_pack = kparams
    B, _, L = x_process.shape
    assert L == LENGTH

    slab = _make_slab(x_case, x_process, t, compute_dtype)
    slab_w = slab.shape[1]

    # ---- batch tiling: minimal padding, >= 2 (even) grid steps for v7x megacore ----
    n_steps = max(MIN_GRID_STEPS, -(-B // TILE_B_MAX))
    if n_steps % 2:
        n_steps += 1
    tile_b = _round_up(-(-B // n_steps), 8)
    b_pad = tile_b * n_steps
    if b_pad != B:
        slab = jnp.pad(slab, ((0, b_pad - B), (0, 0)))

    out = pl.pallas_call(
        _make_kernel(N_LAYERS, N_HEADS, compute_dtype),
        out_shape=jax.ShapeDtypeStruct((b_pad, N_HEADS), jnp.float32),
        grid=(n_steps,),
        in_specs=[pl.BlockSpec((tile_b, slab_w), lambda i: (i, 0)),
                  pl.BlockSpec(w0_pad.shape, lambda i: (0, 0)),    # resident
                  pl.BlockSpec(w_rest.shape, lambda i: (0, 0)),    # resident
                  pl.BlockSpec(b_pack.shape, lambda i: (0, 0))],   # resident
        out_specs=pl.BlockSpec((tile_b, N_HEADS), lambda i: (i, 0)),
        compiler_params=pltpu.CompilerParams(
            dimension_semantics=("parallel",),
            vmem_limit_bytes=32 * 1024 * 1024),
    )(slab, w0_pad, w_rest, b_pack)

    mean = out[:B, :NR_OUTPUTS]
    logvar = out[:B, NR_OUTPUTS:NR_OUTPUTS + 1]
    return mean, logvar


# ---------------- pure-JAX reference (PyTorch NCW semantics) ----------------
def forward_ref(x_case, x_process, t, raw):
    B, _, L = x_process.shape
    t_r = t.reshape(B, 1, L)
    xc_r = jnp.broadcast_to(x_case.reshape(B, 1, 1), (B, 1, L))
    x = jnp.concatenate([x_process, t_r, xc_r], axis=1).astype(jnp.float32)
    for (w, b, gamma, beta, mean, var) in raw['conv']:
        l_out = conv1d_size_out(x.shape[2])
        out = jnp.broadcast_to(b[None, :, None], (B, w.shape[0], l_out))
        for k in range(KERNEL_SIZE):
            out = out + jnp.einsum('oi,bil->bol', w[:, :, k], x[:, :, k:k + l_out])
        out = (out - mean[None, :, None]) / jnp.sqrt(var[None, :, None] + BN_EPS)
        out = out * gamma[None, :, None] + beta[None, :, None]
        x = jnp.maximum(out, 0.0)
    h = x.reshape(B, -1)                                          # channel-major flatten
    for (w, b) in raw['dense']:
        h = jnp.maximum(h @ w.T + b, 0.0)
    wl, bl = raw['last']
    last = jnp.maximum(h @ wl.T + bl, 0.0)
    wm, bm = raw['mean']
    wv, bv = raw['logvar']
    return last @ wm.T + bm, last @ wv.T + bv


if __name__ == "__main__":
    key = jax.random.PRNGKey(0)
    kp, kc, kx, kt = jax.random.split(key, 4)
    B = 4
    x_case = jax.random.normal(kc, (B, INPUT_SIZE_CASE), jnp.float32)
    x_process = jax.random.normal(kx, (B, INPUT_SIZE_PROCESS, LENGTH), jnp.float32)
    t = jax.random.normal(kt, (B, LENGTH), jnp.float32)

    raw, sizes = build_params(kp)
    mean_ref, logvar_ref = forward_ref(x_case, x_process, t, raw)

    # f32 path: tight numerical check of the lowering (banded matrices, relayouts, head)
    kp_f32 = build_kernel_params(raw, sizes, jnp.float32)
    mean_f, logvar_f = jax.block_until_ready(
        forward_pallas(x_case, x_process, t, kp_f32, jnp.float32))
    assert mean_f.shape == (B, NR_OUTPUTS) and logvar_f.shape == (B, 1)
    assert np.allclose(np.asarray(mean_f), np.asarray(mean_ref), rtol=1e-4, atol=1e-4)
    assert np.allclose(np.asarray(logvar_f), np.asarray(logvar_ref), rtol=1e-4, atol=1e-4)

    # bf16 path (default perf config): f32 accumulation, looser tolerance vs f32 reference
    kp_bf16 = build_kernel_params(raw, sizes, jnp.bfloat16)
    mean_b, logvar_b = jax.block_until_ready(
        forward_pallas(x_case, x_process, t, kp_bf16, jnp.bfloat16))
    assert mean_b.shape == (B, NR_OUTPUTS) and logvar_b.shape == (B, 1)
    assert np.allclose(np.asarray(mean_b), np.asarray(mean_ref), rtol=5e-2, atol=5e-2)
    assert np.allclose(np.asarray(logvar_b), np.asarray(logvar_ref), rtol=5e-2, atol=5e-2)

    print("KERNEL_OK")
</pallas_src>

<mosaic_0001>
module attributes {stable_mosaic.version = 11 : i64} {
  func.func @kernel(%arg0: i32, %arg1: memref<8x33xf32, #tpu.memory_space<vmem>>, %arg2: memref<33x128xf32, #tpu.memory_space<vmem>>, %arg3: memref<512x128xf32, #tpu.memory_space<vmem>>, %arg4: memref<8x128xf32, #tpu.memory_space<vmem>>, %arg5: memref<8x2xf32, #tpu.memory_space<vmem>>) attributes {dimension_semantics = [#tpu.dimension_semantics<parallel>], iteration_bounds = array<i64: 2>, scalar_prefetch = 0 : i64, scratch_operands = 0 : i64, tpu.core_type = #tpu.core_type<tc>, window_params = [{transform_indices = @transform_0, window_bounds = array<i64: 8, 33>}, {pipeline_mode = #tpu.pipeline_mode<synchronous>, transform_indices = @transform_1, window_bounds = array<i64: 33, 128>}, {pipeline_mode = #tpu.pipeline_mode<synchronous>, transform_indices = @transform_2, window_bounds = array<i64: 512, 128>}, {pipeline_mode = #tpu.pipeline_mode<synchronous>, transform_indices = @transform_3, window_bounds = array<i64: 8, 128>}, {transform_indices = @transform_4, window_bounds = array<i64: 8, 2>}]} {
    %c0 = arith.constant 0 : index
    %c0_0 = arith.constant 0 : index
    %0 = vector.load %arg1[%c0, %c0_0] : memref<8x33xf32, #tpu.memory_space<vmem>>, vector<8x33xf32>
    %c0_1 = arith.constant 0 : index
    %c0_2 = arith.constant 0 : index
    %1 = vector.load %arg2[%c0_1, %c0_2] : memref<33x128xf32, #tpu.memory_space<vmem>>, vector<33x128xf32>
    %cst = arith.constant dense<0.000000e+00> : vector<8x128xf32>
    %2 = tpu.matmul %0, %1, %cst {dimension_numbers = #tpu.dot_dimension_numbers<[1], [0], [0], [1], [0, 0, 1, 1], [], []>} : vector<8x33xf32>, vector<33x128xf32>, vector<8x128xf32> -> vector<8x128xf32>
    %c0_3 = arith.constant 0 : index
    %c0_4 = arith.constant 0 : index
    %3 = vector.load %arg4[%c0_3, %c0_4] : memref<8x128xf32, #tpu.memory_space<vmem>>, vector<1x128xf32>
    %4 = vector.broadcast %3 : vector<1x128xf32> to vector<8x128xf32>
    %5 = arith.addf %2, %4 : vector<8x128xf32>
    %cst_5 = arith.constant 0.000000e+00 : f32
    %6 = vector.broadcast %cst_5 : f32 to vector<8x128xf32>
    %7 = arith.maximumf %5, %6 : vector<8x128xf32>
    %c0_6 = arith.constant 0 : index
    %c0_7 = arith.constant 0 : index
    %8 = vector.load %arg3[%c0_6, %c0_7] : memref<512x128xf32, #tpu.memory_space<vmem>>, vector<128x128xf32>
    %cst_8 = arith.constant dense<0.000000e+00> : vector<8x128xf32>
    %9 = tpu.matmul %7, %8, %cst_8 {dimension_numbers = #tpu.dot_dimension_numbers<[1], [0], [0], [1], [0, 0, 1, 1], [], []>} : vector<8x128xf32>, vector<128x128xf32>, vector<8x128xf32> -> vector<8x128xf32>
    %c1 = arith.constant 1 : index
    %c0_9 = arith.constant 0 : index
    %10 = vector.load %arg4[%c1, %c0_9] : memref<8x128xf32, #tpu.memory_space<vmem>>, vector<1x128xf32>
    %11 = vector.broadcast %10 : vector<1x128xf32> to vector<8x128xf32>
    %12 = arith.addf %9, %11 : vector<8x128xf32>
    %cst_10 = arith.constant 0.000000e+00 : f32
    %13 = vector.broadcast %cst_10 : f32 to vector<8x128xf32>
    %14 = arith.maximumf %12, %13 : vector<8x128xf32>
    %c128 = arith.constant 128 : index
    %c0_11 = arith.constant 0 : index
    %15 = vector.load %arg3[%c128, %c0_11] : memref<512x128xf32, #tpu.memory_space<vmem>>, vector<128x128xf32>
    %cst_12 = arith.constant dense<0.000000e+00> : vector<8x128xf32>
    %16 = tpu.matmul %14, %15, %cst_12 {dimension_numbers = #tpu.dot_dimension_numbers<[1], [0], [0], [1], [0, 0, 1, 1], [], []>} : vector<8x128xf32>, vector<128x128xf32>, vector<8x128xf32> -> vector<8x128xf32>
    %c2 = arith.constant 2 : index
    %c0_13 = arith.constant 0 : index
    %17 = vector.load %arg4[%c2, %c0_13] : memref<8x128xf32, #tpu.memory_space<vmem>>, vector<1x128xf32>
    %18 = vector.broadcast %17 : vector<1x128xf32> to vector<8x128xf32>
    %19 = arith.addf %16, %18 : vector<8x128xf32>
    %cst_14 = arith.constant 0.000000e+00 : f32
    %20 = vector.broadcast %cst_14 : f32 to vector<8x128xf32>
    %21 = arith.maximumf %19, %20 : vector<8x128xf32>
    %c256 = arith.constant 256 : index
    %c0_15 = arith.constant 0 : index
    %22 = vector.load %arg3[%c256, %c0_15] : memref<512x128xf32, #tpu.memory_space<vmem>>, vector<128x128xf32>
    %cst_16 = arith.constant dense<0.000000e+00> : vector<8x128xf32>
    %23 = tpu.matmul %21, %22, %cst_16 {dimension_numbers = #tpu.dot_dimension_numbers<[1], [0], [0], [1], [0, 0, 1, 1], [], []>} : vector<8x128xf32>, vector<128x128xf32>, vector<8x128xf32> -> vector<8x128xf32>
    %c3 = arith.constant 3 : index
    %c0_17 = arith.constant 0 : index
    %24 = vector.load %arg4[%c3, %c0_17] : memref<8x128xf32, #tpu.memory_space<vmem>>, vector<1x128xf32>
    %25 = vector.broadcast %24 : vector<1x128xf32> to vector<8x128xf32>
    %26 = arith.addf %23, %25 : vector<8x128xf32>
    %cst_18 = arith.constant 0.000000e+00 : f32
    %27 = vector.broadcast %cst_18 : f32 to vector<8x128xf32>
    %28 = arith.maximumf %26, %27 : vector<8x128xf32>
    %c384 = arith.constant 384 : index
    %c0_19 = arith.constant 0 : index
    %29 = vector.load %arg3[%c384, %c0_19] : memref<512x128xf32, #tpu.memory_space<vmem>>, vector<128x128xf32>
    %cst_20 = arith.constant dense<0.000000e+00> : vector<8x128xf32>
    %30 = tpu.matmul %28, %29, %cst_20 {dimension_numbers = #tpu.dot_dimension_numbers<[1], [0], [0], [1], [0, 0, 1, 1], [], []>} : vector<8x128xf32>, vector<128x128xf32>, vector<8x128xf32> -> vector<8x128xf32>
    %c4 = arith.constant 4 : index
    %c0_21 = arith.constant 0 : index
    %31 = vector.load %arg4[%c4, %c0_21] : memref<8x128xf32, #tpu.memory_space<vmem>>, vector<1x128xf32>
    %32 = vector.broadcast %31 : vector<1x128xf32> to vector<8x128xf32>
    %33 = arith.addf %30, %32 : vector<8x128xf32>
    %34 = vector.extract_strided_slice %33 {offsets = [0, 0], sizes = [8, 2], strides = [1, 1]} : vector<8x128xf32> to vector<8x2xf32>
    %c0_22 = arith.constant 0 : index
    %c0_23 = arith.constant 0 : index
    %35 = vector.load %arg5[%c0_22, %c0_23] : memref<8x2xf32, #tpu.memory_space<vmem>>, vector<8x2xf32>
    tpu.vector_store %arg5[%c0_22, %c0_23], %34 {strides = array<i32>} : memref<8x2xf32, #tpu.memory_space<vmem>>, vector<8x2xf32>,
    return
  }
  func.func @transform_0(%arg0: i32) -> (i32, i32) {
    %c0_i32 = arith.constant 0 : i32
    %c0_i32_0 = arith.constant 0 : i32
    return %arg0, %c0_i32 : i32, i32
  }
  func.func @transform_1(%arg0: i32) -> (i32, i32) {
    %c0_i32 = arith.constant 0 : i32
    %c0_i32_0 = arith.constant 0 : i32
    %c0_i32_1 = arith.constant 0 : i32
    return %c0_i32, %c0_i32_0 : i32, i32
  }
  func.func @transform_2(%arg0: i32) -> (i32, i32) {
    %c0_i32 = arith.constant 0 : i32
    %c0_i32_0 = arith.constant 0 : i32
    %c0_i32_1 = arith.constant 0 : i32
    return %c0_i32, %c0_i32_0 : i32, i32
  }
  func.func @transform_3(%arg0: i32) -> (i32, i32) {
    %c0_i32 = arith.constant 0 : i32
    %c0_i32_0 = arith.constant 0 : i32
    %c0_i32_1 = arith.constant 0 : i32
    return %c0_i32, %c0_i32_0 : i32, i32
  }
  func.func @transform_4(%arg0: i32) -> (i32, i32) {
    %c0_i32 = arith.constant 0 : i32
    %c0_i32_0 = arith.constant 0 : i32
    return %arg0, %c0_i32 : i32, i32
  }
}

</mosaic_0001>

<llo_original>
// kernel: tpu_custom_call.1
$region0: #{tpu_custom_call.1}
  #allocation0 [shape = 'u32[]', space=smem, size = 0x4, offset = 0x4, fixed_abs, tag = 'smem constant byte address 0x4 - core index']
  #allocation1 [shape = 'u32[144,128]{1,0:T(1,128)}', space=vmem, size = 0x12000, scoped, tag = 'internal scratch']
  %s0 = inlined_call_operand.hbm [shape: f32[16,33], index: 0, kind: input, shape index: {}]
  %s1 = inlined_call_operand.hbm [shape: f32[33,128], index: 1, kind: input, shape index: {}]
  %s2 = inlined_call_operand.hbm [shape: f32[512,128], index: 2, kind: input, shape index: {}]
  %s3 = inlined_call_operand.hbm [shape: f32[8,128], index: 3, kind: input, shape index: {}]
  %s4 = inlined_call_operand.vmem [shape: f32[16,2], index: 4, kind: output, shape index: {}]
  %s5 = sld [smem:[#allocation0]]
  $region65: #{tpu_custom_call.1} parent=0
    _
  %s7 = ssub.s32 1, %s5
  %s8 = scalar_select 0, %s7, %s5
  $region1: #{tpu_custom_call.1} parent=0
    #allocation2 [shape = 'u8[8192]{0}', space=vmem, size = 0x2000, scoped, tag = 'input window, operand 0']
    #allocation3 [shape = 's32[2]{0}', space=sflag, size = 0x8, scoped, tag = 'scoped memory for tpu_custom_call.1']
    #allocation4 [shape = 'u8[20480]{0}', space=vmem, size = 0x5000, scoped, tag = 'input window, operand 1, single buffered']
    #allocation5 [shape = 's32[1]{0}', space=sflag, size = 0x4, scoped, tag = 'scoped memory for tpu_custom_call.1']
    #allocation6 [shape = 'u8[262144]{0}', space=vmem, size = 0x40000, scoped, tag = 'input window, operand 2, single buffered']
    #allocation7 [shape = 'u8[4096]{0}', space=vmem, size = 0x1000, scoped, tag = 'input window, operand 3, single buffered']
    #allocation8 [shape = 's32[1]{0}', space=sflag, size = 0x4, scoped, tag = 'scoped memory for tpu_custom_call.1']
    %9 = vsyncpa [#allocation3], 0
    %s10 = scalar_lea.sflag [#allocation3], 1
    %11 = vsyncpa %s10, 0
    %12 = vsyncpa [#allocation5], 0
    %13 = vsyncpa [#allocation8], 0
    loop: start=0, step=1, limit=4
    $region2: #{tpu_custom_call.1} parent=1 // loop_pre_header
      _
    $region3: #{tpu_custom_call.1} parent=1 // loop_header
      %s15 = sphi 0, %s19
      %p16 = scmp.ge.s32.totalorder %s15, 4
      %s25 = sphi 0, %s27
      %s28 = sphi 0, %s25
      %s29 = sphi 0, %s28
      %s45 = sphi 0, %s29
      %s49 = sphi 0, %s49
      %s51 = sphi 0, %s49
      %s52 = sphi 0, %s51
      %s66 = sphi 0, %s52
      %s70 = sphi 0, %s70
      %s72 = sphi 0, %s70
      %s73 = sphi 0, %s72
      %s87 = sphi 0, %s73
      %s91 = sphi 0, %s91
      %s93 = sphi 0, %s91
      %s94 = sphi 0, %s93
      %s108 = sphi 0, %s94
      %s114 = sphi 0, %s116
      %s117 = sphi 0, %s114
      %s118 = sphi 0, %s117
      %s134 = sphi 0, %s118
    $region4: #{tpu_custom_call.1} parent=1 // loop_header_branch
      %18 = sbr.rel (%p16) target = $region8
    $region5: #{tpu_custom_call.1} parent=1 // loop_body
      %s20 = ssub.s32 %s15, 1
      %s21 = ssub.s32 %s15, 2
      %s22 = sadd.s32 %s15, 1
      %s23 = ssub.s32 %s15, %s22
      %p24 = scmp.eq.s32.totalorder %s23, 0
      %s26 = sadd.s32 %s25, 1
      %s27 = scalar_select %p24, %s25, %s26
      %p30 = pneg %p24
      %p31 = scmp.eq.s32.totalorder %s15, 1
      %p32 = por %p30, %p31
      %p33 = scmp.ne.s32.totalorder %s25, %s28
      %p34 = scmp.eq.s32.totalorder %s15, 0
      %p35 = por %p33, %p34
      %p36 = scmp.ne.s32.totalorder %s25, %s28
      %p37 = scmp.eq.s32.totalorder %s20, 1
      %p38 = por %p36, %p37
      %p39 = scmp.ne.s32.totalorder %s28, %s29
      %p40 = scmp.eq.s32.totalorder %s20, 0
      %p41 = por %p39, %p40
      %p42 = scmp.ne.s32.totalorder %s28, %s29
      %p43 = scmp.eq.s32.totalorder %s21, 1
      %p44 = por %p42, %p43
      %p46 = scmp.ne.s32.totalorder %s29, %s45
      %p47 = scmp.eq.s32.totalorder %s21, 0
      %p48 = por %p46, %p47
      %s50 = sadd.s32 %s49, 1
      %p53 = scmp.eq.s32.totalorder %s15, 1
      %p54 = scmp.ne.s32.totalorder %s49, %s51
      %p55 = scmp.eq.s32.totalorder %s15, 0
      %p56 = por %p54, %p55
      %p57 = scmp.ne.s32.totalorder %s49, %s51
      %p58 = scmp.eq.s32.totalorder %s20, 1
      %p59 = por %p57, %p58
      %p60 = scmp.ne.s32.totalorder %s51, %s52
      %p61 = scmp.eq.s32.totalorder %s20, 0
      %p62 = por %p60, %p61
      %p63 = scmp.ne.s32.totalorder %s51, %s52
      %p64 = scmp.eq.s32.totalorder %s21, 1
      %p65 = por %p63, %p64
      %p67 = scmp.ne.s32.totalorder %s52, %s66
      %p68 = scmp.eq.s32.totalorder %s21, 0
      %p69 = por %p67, %p68
      %s71 = sadd.s32 %s70, 1
      %p74 = scmp.eq.s32.totalorder %s15, 1
      %p75 = scmp.ne.s32.totalorder %s70, %s72
      %p76 = scmp.eq.s32.totalorder %s15, 0
      %p77 = por %p75, %p76
      %p78 = scmp.ne.s32.totalorder %s70, %s72
      %p79 = scmp.eq.s32.totalorder %s20, 1
      %p80 = por %p78, %p79
      %p81 = scmp.ne.s32.totalorder %s72, %s73
      %p82 = scmp.eq.s32.totalorder %s20, 0
      %p83 = por %p81, %p82
      %p84 = scmp.ne.s32.totalorder %s72, %s73
      %p85 = scmp.eq.s32.totalorder %s21, 1
      %p86 = por %p84, %p85
      %p88 = scmp.ne.s32.totalorder %s73, %s87
      %p89 = scmp.eq.s32.totalorder %s21, 0
      %p90 = por %p88, %p89
      %s92 = sadd.s32 %s91, 1
      %p95 = scmp.eq.s32.totalorder %s15, 1
      %p96 = scmp.ne.s32.totalorder %s91, %s93
      %p97 = scmp.eq.s32.totalorder %s15, 0
      %p98 = por %p96, %p97
      %p99 = scmp.ne.s32.totalorder %s91, %s93
      %p100 = scmp.eq.s32.totalorder %s20, 1
      %p101 = por %p99, %p100
      %p102 = scmp.ne.s32.totalorder %s93, %s94
      %p103 = scmp.eq.s32.totalorder %s20, 0
      %p104 = por %p102, %p103
      %p105 = scmp.ne.s32.totalorder %s93, %s94
      %p106 = scmp.eq.s32.totalorder %s21, 1
      %p107 = por %p105, %p106
      %p109 = scmp.ne.s32.totalorder %s94, %s108
      %p110 = scmp.eq.s32.totalorder %s21, 0
      %p111 = por %p109, %p110
      %s112 = ssub.s32 %s15, %s22
      %p113 = scmp.eq.s32.totalorder %s112, 0
      %s115 = sadd.s32 %s114, 1
      %s116 = scalar_select %p113, %s114, %s115
      %p119 = pneg %p113
      %p120 = scmp.eq.s32.totalorder %s15, 1
      %p121 = por %p119, %p120
      %p122 = scmp.ne.s32.totalorder %s114, %s117
      %p123 = scmp.eq.s32.totalorder %s15, 0
      %p124 = por %p122, %p123
      %p125 = scmp.ne.s32.totalorder %s114, %s117
      %p126 = scmp.eq.s32.totalorder %s20, 1
      %p127 = por %p125, %p126
      %p128 = scmp.ne.s32.totalorder %s117, %s118
      %p129 = scmp.eq.s32.totalorder %s20, 0
      %p130 = por %p128, %p129
      %p131 = scmp.ne.s32.totalorder %s117, %s118
      %p132 = scmp.eq.s32.totalorder %s21, 1
      %p133 = por %p131, %p132
      %p135 = scmp.ne.s32.totalorder %s118, %s134
      %p136 = scmp.eq.s32.totalorder %s21, 0
      %p137 = por %p135, %p136
      %p138 = scmp.le.s32.totalorder 1, %s15
      %p139 = scmp.lt.s32.totalorder %s15, 3
      %p140 = pnand %p138, %p139
      %p141 = pneg %p140
      // Predicated region
      $region9: #{tpu_custom_call.1} parent=5 // pred_check
        _
      $region10: #{tpu_custom_call.1} parent=5 // pred_check_branch
        %143 = sbr.rel (%p140) target = $region12
      $region11: #{tpu_custom_call.1} parent=5 // pred_region
        %s144 = ssub.s32 %s15, 1
        // Predicated region
        $region13: #{tpu_custom_call.1} parent=11 // pred_check
          %p145 = pneg %p62
        $region14: #{tpu_custom_call.1} parent=11 // pred_check_branch
          %147 = sbr.rel (%p145) target = $region16
        $region15: #{tpu_custom_call.1} parent=11 // pred_region
          %s149 = ssub.s32 640, 640
          %150 = vsyncadd [#allocation5], %s149
          %s151 = sshll.u32 [#allocation4], 4
          %s152 = int_to_ptr.vmem [resolvable:$true] %s151
          %157 = dma.hbm_to_vmem [thread:$0]  %s1, 640, %s152, [#allocation5], 128, 128, 8
        $region16: #{tpu_custom_call.1} parent=11 // pred_fallthru
          _
        // Predicated region
        $region17: #{tpu_custom_call.1} parent=11 // pred_check
          %p158 = pneg %p83
        $region18: #{tpu_custom_call.1} parent=11 // pred_check_branch
          %160 = sbr.rel (%p158) target = $region20
        $region19: #{tpu_custom_call.1} parent=11 // pred_region
          %s162 = ssub.s32 8192, 8192
          %163 = vsyncadd [#allocation5], %s162
          %s164 = sshll.u32 [#allocation6], 4
          %s165 = int_to_ptr.vmem [resolvable:$true] %s164
          %170 = dma.hbm_to_vmem [thread:$0]  %s2, 8192, %s165, [#allocation5], 128, 128, 8
        $region20: #{tpu_custom_call.1} parent=11 // pred_fallthru
          _
        // Predicated region
        $region21: #{tpu_custom_call.1} parent=11 // pred_check
          %p171 = pneg %p104
        $region22: #{tpu_custom_call.1} parent=11 // pred_check_branch
          %173 = sbr.rel (%p171) target = $region24
        $region23: #{tpu_custom_call.1} parent=11 // pred_region
          %s175 = ssub.s32 128, 128
          %176 = vsyncadd [#allocation8], %s175
          %s178 = sshll.u32 [#allocation7], 4
          %s179 = int_to_ptr.vmem [resolvable:$true] %s178
          %181 = dma.hbm_to_vmem [thread:$0]  %s3, 128, %s179, [#allocation8]
        $region24: #{tpu_custom_call.1} parent=11 // pred_fallthru
          _
      $region12: #{tpu_custom_call.1} parent=5 // pred_fallthru
        _
      %p182 = scmp.lt.s32.totalorder %s15, 2
      // Predicated region
      $region25: #{tpu_custom_call.1} parent=5 // pred_check
        %p183 = pneg %p182
      $region26: #{tpu_custom_call.1} parent=5 // pred_check_branch
        %185 = sbr.rel (%p183) target = $region28
      $region27: #{tpu_custom_call.1} parent=5 // pred_region
        // Predicated region
        $region29: #{tpu_custom_call.1} parent=27 // pred_check
          %p186 = pneg %p35
        $region30: #{tpu_custom_call.1} parent=27 // pred_check_branch
          %188 = sbr.rel (%p186) target = $region32
        $region31: #{tpu_custom_call.1} parent=27 // pred_region
          %s189 = sand.u32 %s25, 1
          %s190 = scalar_lea.sflag [#allocation3], %s189
          %s191 = sand.u32 %s25, 1
          %s192 = smul.addr %s191, 8
          %s193 = scalar_lea.vmem [#allocation2], %s192
          %s195 = ssub.s32 128, 128
          %196 = vsyncadd %s190, %s195
          %s197 = smul.addr %s15, 128
          %s198 = scalar_lea.hbm %s0, %s197
          %s200 = sshll.u32 %s193, 4
          %s201 = int_to_ptr.vmem [resolvable:$true] %s200
          %203 = dma.hbm_to_vmem [thread:$0]  %s198, 128, %s201, %s190
        $region32: #{tpu_custom_call.1} parent=27 // pred_fallthru
          _
      $region28: #{tpu_custom_call.1} parent=5 // pred_fallthru
        _
      %p204 = scmp.le.s32.totalorder 1, %s15
      %p205 = scmp.lt.s32.totalorder %s15, 3
      %p206 = pnand %p204, %p205
      %p207 = pneg %p206
      // Predicated region
      $region33: #{tpu_custom_call.1} parent=5 // pred_check
        _
      $region34: #{tpu_custom_call.1} parent=5 // pred_check_branch
        %209 = sbr.rel (%p206) target = $region36
      $region35: #{tpu_custom_call.1} parent=5 // pred_region
        %s210 = ssub.s32 %s15, 1
        %s211 = sand.u32 %s28, 1
        %s212 = scalar_lea.sflag [#allocation3], %s211
        %s213 = sand.u32 %s28, 1
        %s214 = smul.addr %s213, 8
        %s215 = scalar_lea.vmem [#allocation2], %s214
        // Predicated region
        $region37: #{tpu_custom_call.1} parent=35 // pred_check
          %p216 = pneg %p41
        $region38: #{tpu_custom_call.1} parent=35 // pred_check_branch
          %218 = sbr.rel (%p216) target = $region40
        $region39: #{tpu_custom_call.1} parent=35 // pred_region
          %219 = dma.done %s212, 128
        $region40: #{tpu_custom_call.1} parent=35 // pred_fallthru
          _
        // Predicated region
        $region41: #{tpu_custom_call.1} parent=35 // pred_check
          %p220 = pneg %p62
        $region42: #{tpu_custom_call.1} parent=35 // pred_check_branch
          %222 = sbr.rel (%p220) target = $region44
        $region43: #{tpu_custom_call.1} parent=35 // pred_region
          %223 = dma.done [#allocation5], 640
        $region44: #{tpu_custom_call.1} parent=35 // pred_fallthru
          _
        // Predicated region
        $region45: #{tpu_custom_call.1} parent=35 // pred_check
          %p224 = pneg %p83
        $region46: #{tpu_custom_call.1} parent=35 // pred_check_branch
          %226 = sbr.rel (%p224) target = $region48
        $region47: #{tpu_custom_call.1} parent=35 // pred_region
          %227 = dma.done [#allocation5], 8192
        $region48: #{tpu_custom_call.1} parent=35 // pred_fallthru
          _
        // Predicated region
        $region49: #{tpu_custom_call.1} parent=35 // pred_check
          %p228 = pneg %p104
        $region50: #{tpu_custom_call.1} parent=35 // pred_check_branch
          %230 = sbr.rel (%p228) target = $region52
        $region51: #{tpu_custom_call.1} parent=35 // pred_region
          %231 = dma.done [#allocation8], 128
        $region52: #{tpu_custom_call.1} parent=35 // pred_fallthru
          _
        %s232 = sand.u32 %s28, 1
        %s233 = scalar_lea.sflag [#allocation3], %s232
        %s234 = sand.u32 %s28, 1
        %s235 = smul.addr %s234, 8
        %s236 = scalar_lea.vmem [#allocation2], %s235
        %p237 = pneg %p41
        %p238 = pneg %p38
        %p239 = pneg %p62
        %p240 = pneg %p59
        %p241 = pneg %p83
        %p242 = pneg %p80
        %p243 = pneg %p104
        %p244 = pneg %p101
        %p245 = pneg %p130
        %p246 = pneg %p127
        %p247 = scmp.lt.s32.totalorder %s20, 1
        %s248 = scalar_select %p247, %s20, 1
        %s249 = smul.addr %s248, 8
        %s250 = scalar_lea.vmem %s4, %s249
        %p251 = scmp.lt.s32.totalorder %s20, 1
        %s252 = scalar_select %p251, %s20, 1
        %s253 = smul.addr %s252, 8
        %s254 = scalar_lea.vmem %s4, %s253
        %v255 = vld [vmem:[%s215] sm:$0xff]
        %v256 = vld [vmem:[#allocation4] sm:$0xff]
        %v257 = vld [vmem:[#allocation4 + $0x8] sm:$0xff]
        %v258 = vld [vmem:[#allocation4 + $0x10] sm:$0xff]
        %v259 = vld [vmem:[#allocation4 + $0x18] sm:$0xff]
        %v260 = vld [vmem:[#allocation4 + $0x20] sm:$0x1]
        %v261 = vld [vmem:[#allocation7] sm:$0x1]
        %v262 = vlaneseq
        %v263 = vshrl.u32 %v262, 7
        %v264 = vsub.s32 0, %v263
        %v265 = vrot.slane %v261, %v264
        %vm266 = vcmask 269312
        %v268 = vsel %vm266, %v255, 0
        %vm270 = vcmask 1040384
        %v272 = vsel %vm270, %v260, 0
        %274 = vmatprep.subr.mxu0 0.0
        %275 = vmatpush1.msra.mxu0 0.0
        %276 = vmatprep.subr.mxu0 0.0
        %277 = vmatpush1.msra.mxu0 0.0
        %278 = vmatprep.subr.mxu0 0.0
        %279 = vmatpush1.msra.mxu0 0.0
        %280 = vmatprep.subr.mxu0 0.0
        %281 = vmatpush1.msra.mxu0 0.0
        %282 = vmatprep.subr.mxu0 0.0
        %283 = vmatpush1.msra.mxu0 0.0
        %284 = vmatprep.subr.mxu0 0.0
        %285 = vmatpush1.msra.mxu0 0.0
        %286 = vmatprep.subr.mxu0 0.0
        %287 = vmatpush1.msra.mxu0 0.0
        %288 = vmatprep.subr.mxu0 0.0
        %289 = vmatpush1.msra.mxu0 0.0
        %290 = vmatprep.subr.mxu0 0.0
        %291 = vmatpush1.msra.mxu0 0.0
        %292 = vmatprep.subr.mxu0 0.0
        %293 = vmatpush1.msra.mxu0 0.0
        %294 = vmatprep.subr.mxu0 0.0
        %295 = vmatpush1.msra.mxu0 0.0
        %296 = vmatprep.subr.mxu0 0.0
        %297 = vmatpush1.msra.mxu0 %v272
        %298 = vmatprep.subr.mxu0 0.0
        %299 = vmatpush1.msra.mxu0 %v259
        %300 = vmatprep.subr.mxu0 0.0
        %301 = vmatpush1.msra.mxu0 %v258
        %302 = vmatprep.subr.mxu0 0.0
        %303 = vmatpush1.msra.mxu0 %v257
        %304 = vmatprep.subr.mxu0 0.0
        %305 = vmatpush1.msra.mxu0 %v256
        %306 = vmatprep.subr.mxu0 0.0
        %307 = vmatpush2.msra.mxu0 0.0
        %308 = vmatprep.subr.mxu0 0.0
        %309 = vmatpush2.msra.mxu0 0.0
        %310 = vmatprep.subr.mxu0 0.0
        %311 = vmatpush2.msra.mxu0 0.0
        %312 = vmatprep.subr.mxu0 0.0
        %313 = vmatpush2.msra.mxu0 0.0
        %314 = vmatprep.subr.mxu0 0.0
        %315 = vmatpush2.msra.mxu0 0.0
        %316 = vmatprep.subr.mxu0 0.0
        %317 = vmatpush2.msra.mxu0 0.0
        %318 = vmatprep.subr.mxu0 0.0
        %319 = vmatpush2.msra.mxu0 0.0
        %320 = vmatprep.subr.mxu0 0.0
        %321 = vmatpush2.msra.mxu0 0.0
        %322 = vmatprep.subr.mxu0 0.0
        %323 = vmatpush2.msra.mxu0 0.0
        %324 = vmatprep.subr.mxu0 0.0
        %325 = vmatpush2.msra.mxu0 0.0
        %326 = vmatprep.subr.mxu0 0.0
        %327 = vmatpush2.msra.mxu0 0.0
        %328 = vmatprep.subr.mxu0 0.0
        %329 = vmatpush2.msra.mxu0 0.0
        %330 = vmatprep.subr.mxu0 0.0
        %331 = vmatpush2.msra.mxu0 0.0
        %332 = vmatprep.subr.mxu0 0.0
        %333 = vmatpush2.msra.mxu0 0.0
        %334 = vmatprep.subr.mxu0 0.0
        %335 = vmatpush2.msra.mxu0 0.0
        %336 = vmatprep.subr.mxu0 0.0
        %337 = vmatpush2.msra.mxu0 0.0
        %338 = vmatprep.mubr.f32.mxu0 0.0
        %339 = vmatmul.mubr.f32.gmra.mxu0 %v268
        %v340 = vpop.f32.mrf.mxu0
        %v341 = vadd.f32 %v265, %v340
        %v342 = vpop.f32.mrf.mxu0
        %343 = vdwg.mxu0
        %v344 = vmax.f32 %v341, 0.0
        %v345 = vld [vmem:[#allocation6] sm:$0xff]
        %v346 = vld [vmem:[#allocation6 + $0x8] sm:$0xff]
        %v347 = vld [vmem:[#allocation6 + $0x10] sm:$0xff]
        %v348 = vld [vmem:[#allocation6 + $0x18] sm:$0xff]
        %v349 = vld [vmem:[#allocation6 + $0x20] sm:$0xff]
        %v350 = vld [vmem:[#allocation6 + $0x28] sm:$0xff]
        %v351 = vld [vmem:[#allocation6 + $0x30] sm:$0xff]
        %v352 = vld [vmem:[#allocation6 + $0x38] sm:$0xff]
        %v353 = vld [vmem:[#allocation6 + $0x40] sm:$0xff]
        %v354 = vld [vmem:[#allocation6 + $0x48] sm:$0xff]
        %v355 = vld [vmem:[#allocation6 + $0x50] sm:$0xff]
        %v356 = vld [vmem:[#allocation6 + $0x58] sm:$0xff]
        %v357 = vld [vmem:[#allocation6 + $0x60] sm:$0xff]
        %v358 = vld [vmem:[#allocation6 + $0x68] sm:$0xff]
        %v359 = vld [vmem:[#allocation6 + $0x70] sm:$0xff]
        %v360 = vld [vmem:[#allocation6 + $0x78] sm:$0xff]
        %v361 = vld [vmem:[#allocation7 + $0x1] sm:$0x1]
        %v362 = vlaneseq
        %v363 = vshrl.u32 %v362, 7
        %v364 = vsub.s32 0, %v363
        %v365 = vrot.slane %v361, %v364
        %366 = vmatprep.subr.mxu0 0.0
        %367 = vmatpush1.msra.mxu0 %v360
        %368 = vmatprep.subr.mxu0 0.0
        %369 = vmatpush1.msra.mxu0 %v359
        %370 = vmatprep.subr.mxu0 0.0
        %371 = vmatpush1.msra.mxu0 %v358
        %372 = vmatprep.subr.mxu0 0.0
        %373 = vmatpush1.msra.mxu0 %v357
        %374 = vmatprep.subr.mxu0 0.0
        %375 = vmatpush1.msra.mxu0 %v356
        %376 = vmatprep.subr.mxu0 0.0
        %377 = vmatpush1.msra.mxu0 %v355
        %378 = vmatprep.subr.mxu0 0.0
        %379 = vmatpush1.msra.mxu0 %v354
        %380 = vmatprep.subr.mxu0 0.0
        %381 = vmatpush1.msra.mxu0 %v353
        %382 = vmatprep.subr.mxu0 0.0
        %383 = vmatpush1.msra.mxu0 %v352
        %384 = vmatprep.subr.mxu0 0.0
        %385 = vmatpush1.msra.mxu0 %v351
        %386 = vmatprep.subr.mxu0 0.0
        %387 = vmatpush1.msra.mxu0 %v350
        %388 = vmatprep.subr.mxu0 0.0
        %389 = vmatpush1.msra.mxu0 %v349
        %390 = vmatprep.subr.mxu0 0.0
        %391 = vmatpush1.msra.mxu0 %v348
        %392 = vmatprep.subr.mxu0 0.0
        %393 = vmatpush1.msra.mxu0 %v347
        %394 = vmatprep.subr.mxu0 0.0
        %395 = vmatpush1.msra.mxu0 %v346
        %396 = vmatprep.subr.mxu0 0.0
        %397 = vmatpush1.msra.mxu0 %v345
        %398 = vmatprep.subr.mxu0 0.0
        %399 = vmatpush2.msra.mxu0 0.0
        %400 = vmatprep.subr.mxu0 0.0
        %401 = vmatpush2.msra.mxu0 0.0
        %402 = vmatprep.subr.mxu0 0.0
        %403 = vmatpush2.msra.mxu0 0.0
        %404 = vmatprep.subr.mxu0 0.0
        %405 = vmatpush2.msra.mxu0 0.0
        %406 = vmatprep.subr.mxu0 0.0
        %407 = vmatpush2.msra.mxu0 0.0
        %408 = vmatprep.subr.mxu0 0.0
        %409 = vmatpush2.msra.mxu0 0.0
        %410 = vmatprep.subr.mxu0 0.0
        %411 = vmatpush2.msra.mxu0 0.0
        %412 = vmatprep.subr.mxu0 0.0
        %413 = vmatpush2.msra.mxu0 0.0
        %414 = vmatprep.subr.mxu0 0.0
        %415 = vmatpush2.msra.mxu0 0.0
        %416 = vmatprep.subr.mxu0 0.0
        %417 = vmatpush2.msra.mxu0 0.0
        %418 = vmatprep.subr.mxu0 0.0
        %419 = vmatpush2.msra.mxu0 0.0
        %420 = vmatprep.subr.mxu0 0.0
        %421 = vmatpush2.msra.mxu0 0.0
        %422 = vmatprep.subr.mxu0 0.0
        %423 = vmatpush2.msra.mxu0 0.0
        %424 = vmatprep.subr.mxu0 0.0
        %425 = vmatpush2.msra.mxu0 0.0
        %426 = vmatprep.subr.mxu0 0.0
        %427 = vmatpush2.msra.mxu0 0.0
        %428 = vmatprep.subr.mxu0 0.0
        %429 = vmatpush2.msra.mxu0 0.0
        %430 = vmatprep.mubr.f32.mxu0 0.0
        %431 = vmatmul.mubr.f32.gmra.mxu0 %v344
        %v432 = vpop.f32.mrf.mxu0
        %v433 = vadd.f32 %v365, %v432
        %v434 = vpop.f32.mrf.mxu0
        %435 = vdwg.mxu0
        %v436 = vmax.f32 %v433, 0.0
        %v437 = vld [vmem:[#allocation6 + $0x80] sm:$0xff]
        %v438 = vld [vmem:[#allocation6 + $0x88] sm:$0xff]
        %v439 = vld [vmem:[#allocation6 + $0x90] sm:$0xff]
        %v440 = vld [vmem:[#allocation6 + $0x98] sm:$0xff]
        %v441 = vld [vmem:[#allocation6 + $0xa0] sm:$0xff]
        %v442 = vld [vmem:[#allocation6 + $0xa8] sm:$0xff]
        %v443 = vld [vmem:[#allocation6 + $0xb0] sm:$0xff]
        %v444 = vld [vmem:[#allocation6 + $0xb8] sm:$0xff]
        %v445 = vld [vmem:[#allocation6 + $0xc0] sm:$0xff]
        %v446 = vld [vmem:[#allocation6 + $0xc8] sm:$0xff]
        %v447 = vld [vmem:[#allocation6 + $0xd0] sm:$0xff]
        %v448 = vld [vmem:[#allocation6 + $0xd8] sm:$0xff]
        %v449 = vld [vmem:[#allocation6 + $0xe0] sm:$0xff]
        %v450 = vld [vmem:[#allocation6 + $0xe8] sm:$0xff]
        %v451 = vld [vmem:[#allocation6 + $0xf0] sm:$0xff]
        %v452 = vld [vmem:[#allocation6 + $0xf8] sm:$0xff]
        %v453 = vld [vmem:[#allocation7 + $0x2] sm:$0x1]
        %v454 = vlaneseq
        %v455 = vshrl.u32 %v454, 7
        %v456 = vsub.s32 0, %v455
        %v457 = vrot.slane %v453, %v456
        %458 = vmatprep.subr.mxu0 0.0
        %459 = vmatpush1.msra.mxu0 %v452
        %460 = vmatprep.subr.mxu0 0.0
        %461 = vmatpush1.msra.mxu0 %v451
        %462 = vmatprep.subr.mxu0 0.0
        %463 = vmatpush1.msra.mxu0 %v450
        %464 = vmatprep.subr.mxu0 0.0
        %465 = vmatpush1.msra.mxu0 %v449
        %466 = vmatprep.subr.mxu0 0.0
        %467 = vmatpush1.msra.mxu0 %v448
        %468 = vmatprep.subr.mxu0 0.0
        %469 = vmatpush1.msra.mxu0 %v447
        %470 = vmatprep.subr.mxu0 0.0
        %471 = vmatpush1.msra.mxu0 %v446
        %472 = vmatprep.subr.mxu0 0.0
        %473 = vmatpush1.msra.mxu0 %v445
        %474 = vmatprep.subr.mxu0 0.0
        %475 = vmatpush1.msra.mxu0 %v444
        %476 = vmatprep.subr.mxu0 0.0
        %477 = vmatpush1.msra.mxu0 %v443
        %478 = vmatprep.subr.mxu0 0.0
        %479 = vmatpush1.msra.mxu0 %v442
        %480 = vmatprep.subr.mxu0 0.0
        %481 = vmatpush1.msra.mxu0 %v441
        %482 = vmatprep.subr.mxu0 0.0
        %483 = vmatpush1.msra.mxu0 %v440
        %484 = vmatprep.subr.mxu0 0.0
        %485 = vmatpush1.msra.mxu0 %v439
        %486 = vmatprep.subr.mxu0 0.0
        %487 = vmatpush1.msra.mxu0 %v438
        %488 = vmatprep.subr.mxu0 0.0
        %489 = vmatpush1.msra.mxu0 %v437
        %490 = vmatprep.subr.mxu0 0.0
        %491 = vmatpush2.msra.mxu0 0.0
        %492 = vmatprep.subr.mxu0 0.0
        %493 = vmatpush2.msra.mxu0 0.0
        %494 = vmatprep.subr.mxu0 0.0
        %495 = vmatpush2.msra.mxu0 0.0
        %496 = vmatprep.subr.mxu0 0.0
        %497 = vmatpush2.msra.mxu0 0.0
        %498 = vmatprep.subr.mxu0 0.0
        %499 = vmatpush2.msra.mxu0 0.0
        %500 = vmatprep.subr.mxu0 0.0
        %501 = vmatpush2.msra.mxu0 0.0
        %502 = vmatprep.subr.mxu0 0.0
        %503 = vmatpush2.msra.mxu0 0.0
        %504 = vmatprep.subr.mxu0 0.0
        %505 = vmatpush2.msra.mxu0 0.0
        %506 = vmatprep.subr.mxu0 0.0
        %507 = vmatpush2.msra.mxu0 0.0
        %508 = vmatprep.subr.mxu0 0.0
        %509 = vmatpush2.msra.mxu0 0.0
        %510 = vmatprep.subr.mxu0 0.0
        %511 = vmatpush2.msra.mxu0 0.0
        %512 = vmatprep.subr.mxu0 0.0
        %513 = vmatpush2.msra.mxu0 0.0
        %514 = vmatprep.subr.mxu0 0.0
        %515 = vmatpush2.msra.mxu0 0.0
        %516 = vmatprep.subr.mxu0 0.0
        %517 = vmatpush2.msra.mxu0 0.0
        %518 = vmatprep.subr.mxu0 0.0
        %519 = vmatpush2.msra.mxu0 0.0
        %520 = vmatprep.subr.mxu0 0.0
        %521 = vmatpush2.msra.mxu0 0.0
        %522 = vmatprep.mubr.f32.mxu0 0.0
        %523 = vmatmul.mubr.f32.gmra.mxu0 %v436
        %v524 = vpop.f32.mrf.mxu0
        %v525 = vadd.f32 %v457, %v524
        %v526 = vpop.f32.mrf.mxu0
        %527 = vdwg.mxu0
        %v528 = vmax.f32 %v525, 0.0
        %v529 = vld [vmem:[#allocation6 + $0x100] sm:$0xff]
        %v530 = vld [vmem:[#allocation6 + $0x108] sm:$0xff]
        %v531 = vld [vmem:[#allocation6 + $0x110] sm:$0xff]
        %v532 = vld [vmem:[#allocation6 + $0x118] sm:$0xff]
        %v533 = vld [vmem:[#allocation6 + $0x120] sm:$0xff]
        %v534 = vld [vmem:[#allocation6 + $0x128] sm:$0xff]
        %v535 = vld [vmem:[#allocation6 + $0x130] sm:$0xff]
        %v536 = vld [vmem:[#allocation6 + $0x138] sm:$0xff]
        %v537 = vld [vmem:[#allocation6 + $0x140] sm:$0xff]
        %v538 = vld [vmem:[#allocation6 + $0x148] sm:$0xff]
        %v539 = vld [vmem:[#allocation6 + $0x150] sm:$0xff]
        %v540 = vld [vmem:[#allocation6 + $0x158] sm:$0xff]
        %v541 = vld [vmem:[#allocation6 + $0x160] sm:$0xff]
        %v542 = vld [vmem:[#allocation6 + $0x168] sm:$0xff]
        %v543 = vld [vmem:[#allocation6 + $0x170] sm:$0xff]
        %v544 = vld [vmem:[#allocation6 + $0x178] sm:$0xff]
        %v545 = vld [vmem:[#allocation7 + $0x3] sm:$0x1]
        %v546 = vlaneseq
        %v547 = vshrl.u32 %v546, 7
        %v548 = vsub.s32 0, %v547
        %v549 = vrot.slane %v545, %v548
        %550 = vmatprep.subr.mxu0 0.0
        %551 = vmatpush1.msra.mxu0 %v544
        %552 = vmatprep.subr.mxu0 0.0
        %553 = vmatpush1.msra.mxu0 %v543
        %554 = vmatprep.subr.mxu0 0.0
        %555 = vmatpush1.msra.mxu0 %v542
        %556 = vmatprep.subr.mxu0 0.0
        %557 = vmatpush1.msra.mxu0 %v541
        %558 = vmatprep.subr.mxu0 0.0
        %559 = vmatpush1.msra.mxu0 %v540
        %560 = vmatprep.subr.mxu0 0.0
        %561 = vmatpush1.msra.mxu0 %v539
        %562 = vmatprep.subr.mxu0 0.0
        %563 = vmatpush1.msra.mxu0 %v538
        %564 = vmatprep.subr.mxu0 0.0
        %565 = vmatpush1.msra.mxu0 %v537
        %566 = vmatprep.subr.mxu0 0.0
        %567 = vmatpush1.msra.mxu0 %v536
        %568 = vmatprep.subr.mxu0 0.0
        %569 = vmatpush1.msra.mxu0 %v535
        %570 = vmatprep.subr.mxu0 0.0
        %571 = vmatpush1.msra.mxu0 %v534
        %572 = vmatprep.subr.mxu0 0.0
        %573 = vmatpush1.msra.mxu0 %v533
        %574 = vmatprep.subr.mxu0 0.0
        %575 = vmatpush1.msra.mxu0 %v532
        %576 = vmatprep.subr.mxu0 0.0
        %577 = vmatpush1.msra.mxu0 %v531
        %578 = vmatprep.subr.mxu0 0.0
        %579 = vmatpush1.msra.mxu0 %v530
        %580 = vmatprep.subr.mxu0 0.0
        %581 = vmatpush1.msra.mxu0 %v529
        %582 = vmatprep.subr.mxu0 0.0
        %583 = vmatpush2.msra.mxu0 0.0
        %584 = vmatprep.subr.mxu0 0.0
        %585 = vmatpush2.msra.mxu0 0.0
        %586 = vmatprep.subr.mxu0 0.0
        %587 = vmatpush2.msra.mxu0 0.0
        %588 = vmatprep.subr.mxu0 0.0
        %589 = vmatpush2.msra.mxu0 0.0
        %590 = vmatprep.subr.mxu0 0.0
        %591 = vmatpush2.msra.mxu0 0.0
        %592 = vmatprep.subr.mxu0 0.0
        %593 = vmatpush2.msra.mxu0 0.0
        %594 = vmatprep.subr.mxu0 0.0
        %595 = vmatpush2.msra.mxu0 0.0
        %596 = vmatprep.subr.mxu0 0.0
        %597 = vmatpush2.msra.mxu0 0.0
        %598 = vmatprep.subr.mxu0 0.0
        %599 = vmatpush2.msra.mxu0 0.0
        %600 = vmatprep.subr.mxu0 0.0
        %601 = vmatpush2.msra.mxu0 0.0
        %602 = vmatprep.subr.mxu0 0.0
        %603 = vmatpush2.msra.mxu0 0.0
        %604 = vmatprep.subr.mxu0 0.0
        %605 = vmatpush2.msra.mxu0 0.0
        %606 = vmatprep.subr.mxu0 0.0
        %607 = vmatpush2.msra.mxu0 0.0
        %608 = vmatprep.subr.mxu0 0.0
        %609 = vmatpush2.msra.mxu0 0.0
        %610 = vmatprep.subr.mxu0 0.0
        %611 = vmatpush2.msra.mxu0 0.0
        %612 = vmatprep.subr.mxu0 0.0
        %613 = vmatpush2.msra.mxu0 0.0
        %614 = vmatprep.mubr.f32.mxu0 0.0
        %615 = vmatmul.mubr.f32.gmra.mxu0 %v528
        %v616 = vpop.f32.mrf.mxu0
        %v617 = vadd.f32 %v549, %v616
        %v618 = vpop.f32.mrf.mxu0
        %619 = vdwg.mxu0
        %v620 = vmax.f32 %v617, 0.0
        %v621 = vld [vmem:[#allocation6 + $0x180] sm:$0xff]
        %v622 = vld [vmem:[#allocation6 + $0x188] sm:$0xff]
        %v623 = vld [vmem:[#allocation6 + $0x190] sm:$0xff]
        %v624 = vld [vmem:[#allocation6 + $0x198] sm:$0xff]
        %v625 = vld [vmem:[#allocation6 + $0x1a0] sm:$0xff]
        %v626 = vld [vmem:[#allocation6 + $0x1a8] sm:$0xff]
        %v627 = vld [vmem:[#allocation6 + $0x1b0] sm:$0xff]
        %v628 = vld [vmem:[#allocation6 + $0x1b8] sm:$0xff]
        %v629 = vld [vmem:[#allocation6 + $0x1c0] sm:$0xff]
        %v630 = vld [vmem:[#allocation6 + $0x1c8] sm:$0xff]
        %v631 = vld [vmem:[#allocation6 + $0x1d0] sm:$0xff]
        %v632 = vld [vmem:[#allocation6 + $0x1d8] sm:$0xff]
        %v633 = vld [vmem:[#allocation6 + $0x1e0] sm:$0xff]
        %v634 = vld [vmem:[#allocation6 + $0x1e8] sm:$0xff]
        %v635 = vld [vmem:[#allocation6 + $0x1f0] sm:$0xff]
        %v636 = vld [vmem:[#allocation6 + $0x1f8] sm:$0xff]
        %v637 = vld [vmem:[#allocation7 + $0x4] sm:$0x1]
        %v638 = vlaneseq
        %v639 = vshrl.u32 %v638, 7
        %v640 = vsub.s32 0, %v639
        %v641 = vrot.slane %v637, %v640
        %642 = vmatprep.subr.mxu0 0.0
        %643 = vmatpush1.msra.mxu0 %v636
        %644 = vmatprep.subr.mxu0 0.0
        %645 = vmatpush1.msra.mxu0 %v635
        %646 = vmatprep.subr.mxu0 0.0
        %647 = vmatpush1.msra.mxu0 %v634
        %648 = vmatprep.subr.mxu0 0.0
        %649 = vmatpush1.msra.mxu0 %v633
        %650 = vmatprep.subr.mxu0 0.0
        %651 = vmatpush1.msra.mxu0 %v632
        %652 = vmatprep.subr.mxu0 0.0
        %653 = vmatpush1.msra.mxu0 %v631
        %654 = vmatprep.subr.mxu0 0.0
        %655 = vmatpush1.msra.mxu0 %v630
        %656 = vmatprep.subr.mxu0 0.0
        %657 = vmatpush1.msra.mxu0 %v629
        %658 = vmatprep.subr.mxu0 0.0
        %659 = vmatpush1.msra.mxu0 %v628
        %660 = vmatprep.subr.mxu0 0.0
        %661 = vmatpush1.msra.mxu0 %v627
        %662 = vmatprep.subr.mxu0 0.0
        %663 = vmatpush1.msra.mxu0 %v626
        %664 = vmatprep.subr.mxu0 0.0
        %665 = vmatpush1.msra.mxu0 %v625
        %666 = vmatprep.subr.mxu0 0.0
        %667 = vmatpush1.msra.mxu0 %v624
        %668 = vmatprep.subr.mxu0 0.0
        %669 = vmatpush1.msra.mxu0 %v623
        %670 = vmatprep.subr.mxu0 0.0
        %671 = vmatpush1.msra.mxu0 %v622
        %672 = vmatprep.subr.mxu0 0.0
        %673 = vmatpush1.msra.mxu0 %v621
        %674 = vmatprep.subr.mxu0 0.0
        %675 = vmatpush2.msra.mxu0 0.0
        %676 = vmatprep.subr.mxu0 0.0
        %677 = vmatpush2.msra.mxu0 0.0
        %678 = vmatprep.subr.mxu0 0.0
        %679 = vmatpush2.msra.mxu0 0.0
        %680 = vmatprep.subr.mxu0 0.0
        %681 = vmatpush2.msra.mxu0 0.0
        %682 = vmatprep.subr.mxu0 0.0
        %683 = vmatpush2.msra.mxu0 0.0
        %684 = vmatprep.subr.mxu0 0.0
        %685 = vmatpush2.msra.mxu0 0.0
        %686 = vmatprep.subr.mxu0 0.0
        %687 = vmatpush2.msra.mxu0 0.0
        %688 = vmatprep.subr.mxu0 0.0
        %689 = vmatpush2.msra.mxu0 0.0
        %690 = vmatprep.subr.mxu0 0.0
        %691 = vmatpush2.msra.mxu0 0.0
        %692 = vmatprep.subr.mxu0 0.0
        %693 = vmatpush2.msra.mxu0 0.0
        %694 = vmatprep.subr.mxu0 0.0
        %695 = vmatpush2.msra.mxu0 0.0
        %696 = vmatprep.subr.mxu0 0.0
        %697 = vmatpush2.msra.mxu0 0.0
        %698 = vmatprep.subr.mxu0 0.0
        %699 = vmatpush2.msra.mxu0 0.0
        %700 = vmatprep.subr.mxu0 0.0
        %701 = vmatpush2.msra.mxu0 0.0
        %702 = vmatprep.subr.mxu0 0.0
        %703 = vmatpush2.msra.mxu0 0.0
        %704 = vmatprep.subr.mxu0 0.0
        %705 = vmatpush2.msra.mxu0 0.0
        %706 = vmatprep.mubr.f32.mxu0 0.0
        %707 = vmatmul.mubr.f32.gmra.mxu0 %v620
        %v708 = vpop.f32.mrf.mxu0
        %v709 = vadd.f32 %v641, %v708
        %v710 = vpop.f32.mrf.mxu0
        %711 = vdwg.mxu0
        %vm712 = vcmask 15360
        %713 = vst.msk [vmem:[%s254] sm:$0xff] %vm712, %v709
        %p714 = scmp.lt.s32.totalorder %s20, 1
        %s715 = scalar_select %p714, %s20, 1
        %s716 = smul.addr %s715, 8
        %s717 = scalar_lea.vmem %s4, %s716
        // Predicated region
        $region53: #{tpu_custom_call.1} parent=35 // pred_check
          %p718 = pneg %p127
        $region54: #{tpu_custom_call.1} parent=35 // pred_check_branch
          %720 = sbr.rel (%p718) target = $region56
        $region55: #{tpu_custom_call.1} parent=35 // pred_region
          _
        $region56: #{tpu_custom_call.1} parent=35 // pred_fallthru
          _
      $region36: #{tpu_custom_call.1} parent=5 // pred_fallthru
        _
      %p721 = scmp.le.s32.totalorder 2, %s15
      // Predicated region
      $region57: #{tpu_custom_call.1} parent=5 // pred_check
        %p722 = pneg %p721
      $region58: #{tpu_custom_call.1} parent=5 // pred_check_branch
        %724 = sbr.rel (%p722) target = $region60
      $region59: #{tpu_custom_call.1} parent=5 // pred_region
        %s725 = ssub.s32 %s15, 2
        // Predicated region
        $region61: #{tpu_custom_call.1} parent=59 // pred_check
          %p726 = pneg %p133
        $region62: #{tpu_custom_call.1} parent=59 // pred_check_branch
          %728 = sbr.rel (%p726) target = $region64
        $region63: #{tpu_custom_call.1} parent=59 // pred_region
          %p729 = scmp.lt.s32.totalorder %s21, 1
          %s730 = scalar_select %p729, %s21, 1
          %s731 = smul.addr %s730, 8
          %s732 = scalar_lea.vmem %s4, %s731
        $region64: #{tpu_custom_call.1} parent=59 // pred_fallthru
          _
      $region60: #{tpu_custom_call.1} parent=5 // pred_fallthru
        _
    $region6: #{tpu_custom_call.1} parent=1 // loop_footer
      %s19 = sadd.s32 1, %s15
    $region7: #{tpu_custom_call.1} parent=1 // loop_footer_branch
      %14 = sbr.rel target = $region3
    $region8: #{tpu_custom_call.1} parent=1 // loop_exit
      _
    %733 = vsyncpa [#allocation3], 1
    %s734 = scalar_lea.sflag [#allocation3], 1
    %735 = vsyncpa %s734, 1
    %736 = vsyncpa [#allocation5], 1
    %737 = vsyncpa [#allocation8], 1

</llo_original>
